<compile_context>
chip_gen: v6e
topology: v6e:2x2x1
jax: 0.10.0
libtpu: 0.0.40
codegen_flags: <defaults>
</compile_context>

<pallas_src>
import math

import jax
import jax.numpy as jnp
from jax.experimental import pallas as pl
from jax.experimental.pallas import tpu as pltpu

EPS = 1e-6


# ---------------- kernel-side helpers ----------------

def _ln_rows_f32(x, a, b):
    """Row-wise LayerNorm (f32) matching the PyTorch module: unbiased std, eps on std."""
    d = x.shape[-1]
    mean = jnp.mean(x, axis=-1, keepdims=True)
    xc = x - mean
    # torch.std default = unbiased estimator (divide by N-1)
    var = jnp.sum(xc * xc, axis=-1, keepdims=True) * (1.0 / (d - 1))
    std = jnp.sqrt(var)
    # Per-row reciprocal on the (TM, 1) column, then a broadcasted multiply.
    inv = pl.reciprocal(std + EPS)
    return a * (xc * inv) + b


# ---------------- Pallas kernels ----------------

def _fused_ln_linear_residual_kernel(x_ref, a_ref, b_ref, w_ref, bias_ref, o_ref):
    # x_ref: (TM, D)   a_ref, b_ref: (1, D)   w_ref: (D, TN)   bias_ref: (1, TN)
    # o_ref: (TM, TN)
    tn = o_ref.shape[-1]
    d = x_ref.shape[-1]

    x = x_ref[...].astype(jnp.float32)
    normed = _ln_rows_f32(
        x, a_ref[...].astype(jnp.float32), b_ref[...].astype(jnp.float32))

    # MXU matmul; weight dtype (f32 or bf16) decides input precision, accumulate in f32.
    y = jnp.dot(normed.astype(w_ref.dtype), w_ref[...],
                preferred_element_type=jnp.float32)
    y = y + bias_ref[...].astype(jnp.float32)

    # Residual: same rows of x, the TN output columns owned by this grid step.
    if tn == d:                       # common case: single column block, no slicing
        x_res = x
    else:
        col0 = pl.program_id(1) * tn
        if tn % 128 == 0:
            col0 = pl.multiple_of(col0, 128)
        x_res = x_ref[:, pl.ds(col0, tn)].astype(jnp.float32)

    # dropout is identity in eval mode => plain residual add in the epilogue.
    o_ref[...] = (y + x_res).astype(o_ref.dtype)


def _layernorm_kernel(x_ref, a_ref, b_ref, o_ref):
    x = x_ref[...].astype(jnp.float32)
    o_ref[...] = _ln_rows_f32(
        x, a_ref[...].astype(jnp.float32),
        b_ref[...].astype(jnp.float32)).astype(o_ref.dtype)


def _residual_add_kernel(x_ref, y_ref, o_ref):
    # x + dropout(sublayer_out); dropout is identity in eval mode.
    o_ref[...] = x_ref[...] + y_ref[...]


# ---------------- host-side helpers ----------------

def _pick_tile(n, want, align=8):
    """Largest tile <= want that divides n and is a multiple of `align` (or == n)."""
    want = max(1, min(want, n))
    if n % want == 0 and (want % align == 0 or want == n):
        return want
    for t in range(want, 0, -1):
        if n % t == 0 and (t % align == 0 or t == n):
            return t
    return n


def _compiler_params(grid_len, vmem_estimate_bytes):
    kwargs = dict(dimension_semantics=("parallel",) * grid_len)
    # Default scoped VMEM is ~32 MiB on v6e/v7x (16 MiB on v5e). Only raise when
    # needed, and stay well under v7x's 64 MiB physical VMEM.
    if vmem_estimate_bytes > 30 * 1024 * 1024:
        kwargs["vmem_limit_bytes"] = min(int(vmem_estimate_bytes * 1.25),
                                         56 * 1024 * 1024)
    return pltpu.CompilerParams(**kwargs)


# ---------------- wrappers ----------------

def sublayer_connection_linear(x, a_2, b_2, w, bias, *,
                               tile_m=512, tile_n=None,
                               compute_dtype=jnp.float32):
    """Fused SublayerConnection with a Linear(size, size) sublayer:
         out = x + dropout(LayerNorm(x) @ w + bias)     (dropout = identity, eval mode)
       One row-tiled Pallas kernel: LN -> MXU matmul -> bias -> residual.
    """
    *lead, d = x.shape
    n = math.prod(lead)
    x2d = x.reshape(n, d)

    if tile_n is None:
        tile_n = d if d <= 512 else 512          # keep the resident weight block modest
    tile_n = _pick_tile(d, tile_n, align=128 if d % 128 == 0 else 1)
    tile_m = _pick_tile(n, tile_m, align=8)
    grid = (n // tile_m, d // tile_n)

    w_c = w.astype(compute_dtype)                # bf16 halves HBM bytes + 2x MXU rate
    a2 = a_2.reshape(1, d).astype(jnp.float32)
    b2 = b_2.reshape(1, d).astype(jnp.float32)
    bias2 = bias.reshape(1, d).astype(jnp.float32)

    w_item = 2 if compute_dtype == jnp.bfloat16 else 4
    x_item = x2d.dtype.itemsize
    vmem_est = (2 * tile_m * d * x_item          # x rows (double buffered)
                + 2 * d * tile_n * w_item        # weight block
                + 2 * tile_m * tile_n * x_item   # output block
                + 4 * d * 4)                     # a_2, b_2, bias

    out2d = pl.pallas_call(
        _fused_ln_linear_residual_kernel,
        out_shape=jax.ShapeDtypeStruct((n, d), x.dtype),
        grid=grid,
        in_specs=[
            pl.BlockSpec((tile_m, d), lambda i, j: (i, 0)),   # x rows (reused across j)
            pl.BlockSpec((1, d), lambda i, j: (0, 0)),        # a_2 (resident)
            pl.BlockSpec((1, d), lambda i, j: (0, 0)),        # b_2 (resident)
            pl.BlockSpec((d, tile_n), lambda i, j: (0, j)),   # weight column block
            pl.BlockSpec((1, tile_n), lambda i, j: (0, j)),   # bias column block
        ],
        out_specs=pl.BlockSpec((tile_m, tile_n), lambda i, j: (i, j)),
        compiler_params=_compiler_params(len(grid), vmem_est),
    )(x2d, a2, b2, w_c, bias2)
    return out2d.reshape(x.shape)


def pallas_layernorm(x2d, a_2, b_2, *, tile_m=512):
    n, d = x2d.shape
    tile_m = _pick_tile(n, tile_m, align=8)
    return pl.pallas_call(
        _layernorm_kernel,
        out_shape=jax.ShapeDtypeStruct((n, d), x2d.dtype),
        grid=(n // tile_m,),
        in_specs=[pl.BlockSpec((tile_m, d), lambda i: (i, 0)),
                  pl.BlockSpec((1, d), lambda i: (0, 0)),
                  pl.BlockSpec((1, d), lambda i: (0, 0))],
        out_specs=pl.BlockSpec((tile_m, d), lambda i: (i, 0)),
        compiler_params=_compiler_params(1, 6 * tile_m * d * x2d.dtype.itemsize),
    )(x2d, a_2.reshape(1, d), b_2.reshape(1, d))


def pallas_residual_add(x2d, y2d, *, tile_m=1024):
    n, d = x2d.shape
    tile_m = _pick_tile(n, tile_m, align=8)
    return pl.pallas_call(
        _residual_add_kernel,
        out_shape=jax.ShapeDtypeStruct((n, d), x2d.dtype),
        grid=(n // tile_m,),
        in_specs=[pl.BlockSpec((tile_m, d), lambda i: (i, 0)),
                  pl.BlockSpec((tile_m, d), lambda i: (i, 0))],
        out_specs=pl.BlockSpec((tile_m, d), lambda i: (i, 0)),
        compiler_params=_compiler_params(1, 6 * tile_m * d * x2d.dtype.itemsize),
    )(x2d, y2d)


def sublayer_connection(x, a_2, b_2, sublayer_fn):
    """Generic path for an arbitrary (opaque) sublayer callable -- cannot be fused.
    x + dropout(sublayer(LayerNorm(x))); dropout in eval mode (identity)."""
    # TODO(synk): training-mode dropout (stochastic masking) not reproduced.
    *lead, d = x.shape
    n = math.prod(lead)
    x2d = x.reshape(n, d)
    normed = pallas_layernorm(x2d, a_2, b_2).reshape(x.shape)
    sub_out = sublayer_fn(normed).reshape(n, d)
    return pallas_residual_add(x2d, sub_out).reshape(x.shape)


# ---------------- pure-JAX reference ----------------

def _ref_sublayer_connection(x, a_2, b_2, sublayer_fn):
    mean = jnp.mean(x, axis=-1, keepdims=True)
    std = jnp.std(x, axis=-1, keepdims=True, ddof=1)   # unbiased, like torch.std
    normed = a_2 * (x - mean) / (std + EPS) + b_2
    return x + sublayer_fn(normed)


if __name__ == "__main__":
    # Small demo: batch=2, seq=64, hidden=128 (lane-dense feature dim).
    B, S, D = 2, 64, 128
    key = jax.random.PRNGKey(0)
    kx, ka, kb, kw, kbias = jax.random.split(key, 5)

    x = jax.random.normal(kx, (B, S, D), dtype=jnp.float32)
    # LayerNorm params (__init__ uses ones/zeros; perturb to exercise scale/shift).
    a_2 = 1.0 + 0.1 * jax.random.normal(ka, (D,), dtype=jnp.float32)
    b_2 = 0.05 * jax.random.normal(kb, (D,), dtype=jnp.float32)
    # Representative sublayer: Linear(D, D).
    w = 0.05 * jax.random.normal(kw, (D, D), dtype=jnp.float32)
    bias = 0.01 * jax.random.normal(kbias, (D,), dtype=jnp.float32)

    ref = _ref_sublayer_connection(x, a_2, b_2, lambda h: h @ w + bias)

    # Fused kernel, f32 MXU inputs (tile_m=64 -> 2 row tiles, exercises pipelining).
    out_f32 = sublayer_connection_linear(
        x, a_2, b_2, w, bias, tile_m=64, compute_dtype=jnp.float32)
    out_f32 = jax.block_until_ready(out_f32)
    assert out_f32.shape == (B, S, D)
    assert jnp.allclose(out_f32, ref, atol=2e-3, rtol=2e-3), "fused f32 mismatch"

    # Fused kernel, bf16 MXU inputs (faster path on v6e/v7x); looser tolerance.
    out_bf16 = sublayer_connection_linear(
        x, a_2, b_2, w, bias, tile_m=64, compute_dtype=jnp.bfloat16)
    out_bf16 = jax.block_until_ready(out_bf16)
    assert jnp.allclose(out_bf16, ref, atol=3e-2, rtol=3e-2), "fused bf16 mismatch"

    # Generic (arbitrary-callable sublayer) path sanity check.
    out_gen = sublayer_connection(x, a_2, b_2, lambda h: h @ w + bias)
    out_gen = jax.block_until_ready(out_gen)
    assert jnp.allclose(out_gen, ref, atol=2e-3, rtol=2e-3), "generic path mismatch"

    print("KERNEL_OK")
</pallas_src>

<mosaic_0001>
module attributes {stable_mosaic.version = 11 : i64} {
  func.func @_fused_ln_linear_residual_kernel(%arg0: i32, %arg1: i32, %arg2: memref<64x128xf32, #tpu.memory_space<vmem>>, %arg3: memref<1x128xf32, #tpu.memory_space<vmem>>, %arg4: memref<1x128xf32, #tpu.memory_space<vmem>>, %arg5: memref<128x128xf32, #tpu.memory_space<vmem>>, %arg6: memref<1x128xf32, #tpu.memory_space<vmem>>, %arg7: memref<64x128xf32, #tpu.memory_space<vmem>>) attributes {dimension_semantics = [#tpu.dimension_semantics<parallel>, #tpu.dimension_semantics<parallel>], iteration_bounds = array<i64: 2, 1>, scalar_prefetch = 0 : i64, scratch_operands = 0 : i64, tpu.core_type = #tpu.core_type<tc>, window_params = [{transform_indices = @transform_0, window_bounds = array<i64: 64, 128>}, {pipeline_mode = #tpu.pipeline_mode<synchronous>, transform_indices = @transform_1, window_bounds = array<i64: 1, 128>}, {pipeline_mode = #tpu.pipeline_mode<synchronous>, transform_indices = @transform_2, window_bounds = array<i64: 1, 128>}, {transform_indices = @transform_3, window_bounds = array<i64: 128, 128>}, {transform_indices = @transform_4, window_bounds = array<i64: 1, 128>}, {transform_indices = @transform_5, window_bounds = array<i64: 64, 128>}]} {
    %c0 = arith.constant 0 : index
    %c0_0 = arith.constant 0 : index
    %0 = vector.load %arg2[%c0, %c0_0] : memref<64x128xf32, #tpu.memory_space<vmem>>, vector<64x128xf32>
    %c0_1 = arith.constant 0 : index
    %c0_2 = arith.constant 0 : index
    %1 = vector.load %arg3[%c0_1, %c0_2] : memref<1x128xf32, #tpu.memory_space<vmem>>, vector<1x128xf32>
    %c0_3 = arith.constant 0 : index
    %c0_4 = arith.constant 0 : index
    %2 = vector.load %arg4[%c0_3, %c0_4] : memref<1x128xf32, #tpu.memory_space<vmem>>, vector<1x128xf32>
    %cst = arith.constant dense<0.000000e+00> : vector<64xf32>
    %3 = vector.multi_reduction <add>, %0, %cst [1] : vector<64x128xf32> to vector<64xf32>
    %4 = vector.shape_cast %3 : vector<64xf32> to vector<64x1xf32>
    %cst_5 = arith.constant 1.280000e+02 : f32
    %5 = vector.broadcast %cst_5 : f32 to vector<64x1xf32>
    %6 = arith.divf %4, %5 : vector<64x1xf32>
    %7 = vector.broadcast %6 : vector<64x1xf32> to vector<64x128xf32>
    %8 = arith.subf %0, %7 : vector<64x128xf32>
    %9 = arith.mulf %8, %8 : vector<64x128xf32>
    %cst_6 = arith.constant dense<0.000000e+00> : vector<64xf32>
    %10 = vector.multi_reduction <add>, %9, %cst_6 [1] : vector<64x128xf32> to vector<64xf32>
    %11 = vector.shape_cast %10 : vector<64xf32> to vector<64x1xf32>
    %cst_7 = arith.constant 0.00787401571 : f32
    %12 = vector.broadcast %cst_7 : f32 to vector<64x1xf32>
    %13 = arith.mulf %11, %12 : vector<64x1xf32>
    %14 = math.sqrt %13 : vector<64x1xf32>
    %cst_8 = arith.constant 9.99999997E-7 : f32
    %15 = vector.broadcast %cst_8 : f32 to vector<64x1xf32>
    %16 = arith.addf %14, %15 : vector<64x1xf32>
    %17 = tpu.reciprocal %16 : vector<64x1xf32> -> vector<64x1xf32>
    %18 = vector.broadcast %17 : vector<64x1xf32> to vector<64x128xf32>
    %19 = arith.mulf %8, %18 : vector<64x128xf32>
    %20 = vector.broadcast %1 : vector<1x128xf32> to vector<64x128xf32>
    %21 = arith.mulf %20, %19 : vector<64x128xf32>
    %22 = vector.broadcast %2 : vector<1x128xf32> to vector<64x128xf32>
    %23 = arith.addf %21, %22 : vector<64x128xf32>
    %c0_9 = arith.constant 0 : index
    %c0_10 = arith.constant 0 : index
    %24 = vector.load %arg5[%c0_9, %c0_10] : memref<128x128xf32, #tpu.memory_space<vmem>>, vector<128x128xf32>
    %cst_11 = arith.constant dense<0.000000e+00> : vector<64x128xf32>
    %25 = tpu.matmul %23, %24, %cst_11 {dimension_numbers = #tpu.dot_dimension_numbers<[1], [0], [0], [1], [0, 0, 1, 1], [], []>} : vector<64x128xf32>, vector<128x128xf32>, vector<64x128xf32> -> vector<64x128xf32>
    %c0_12 = arith.constant 0 : index
    %c0_13 = arith.constant 0 : index
    %26 = vector.load %arg6[%c0_12, %c0_13] : memref<1x128xf32, #tpu.memory_space<vmem>>, vector<1x128xf32>
    %27 = vector.broadcast %26 : vector<1x128xf32> to vector<64x128xf32>
    %28 = arith.addf %25, %27 : vector<64x128xf32>
    %29 = arith.addf %28, %0 : vector<64x128xf32>
    %c0_14 = arith.constant 0 : index
    %c0_15 = arith.constant 0 : index
    %30 = vector.load %arg7[%c0_14, %c0_15] : memref<64x128xf32, #tpu.memory_space<vmem>>, vector<64x128xf32>
    tpu.vector_store %arg7[%c0_14, %c0_15], %29 {strides = array<i32>} : memref<64x128xf32, #tpu.memory_space<vmem>>, vector<64x128xf32>,
    return
  }
  func.func @transform_0(%arg0: i32, %arg1: i32) -> (i32, i32) {
    %c0_i32 = arith.constant 0 : i32
    %c0_i32_0 = arith.constant 0 : i32
    return %arg0, %c0_i32 : i32, i32
  }
  func.func @transform_1(%arg0: i32, %arg1: i32) -> (i32, i32) {
    %c0_i32 = arith.constant 0 : i32
    %c0_i32_0 = arith.constant 0 : i32
    %c0_i32_1 = arith.constant 0 : i32
    return %c0_i32, %c0_i32_0 : i32, i32
  }
  func.func @transform_2(%arg0: i32, %arg1: i32) -> (i32, i32) {
    %c0_i32 = arith.constant 0 : i32
    %c0_i32_0 = arith.constant 0 : i32
    %c0_i32_1 = arith.constant 0 : i32
    return %c0_i32, %c0_i32_0 : i32, i32
  }
  func.func @transform_3(%arg0: i32, %arg1: i32) -> (i32, i32) {
    %c0_i32 = arith.constant 0 : i32
    %c0_i32_0 = arith.constant 0 : i32
    return %c0_i32, %arg1 : i32, i32
  }
  func.func @transform_4(%arg0: i32, %arg1: i32) -> (i32, i32) {
    %c0_i32 = arith.constant 0 : i32
    %c0_i32_0 = arith.constant 0 : i32
    return %c0_i32, %arg1 : i32, i32
  }
  func.func @transform_5(%arg0: i32, %arg1: i32) -> (i32, i32) {
    %c0_i32 = arith.constant 0 : i32
    return %arg0, %arg1 : i32, i32
  }
}

</mosaic_0001>

<llo_original>
// kernel: tpu_custom_call.1
$region0: #{tpu_custom_call.1}
  #allocation0 [shape = 'u32[]', space=smem, size = 0x4, offset = 0x4, fixed_abs, tag = 'smem constant byte address 0x4 - core index']
  #allocation1 [shape = 'u32[144,128]{1,0:T(1,128)}', space=vmem, size = 0x12000, scoped, tag = 'internal scratch']
  %s0 = inlined_call_operand.hbm [shape: f32[128,128], index: 0, kind: input, shape index: {}]
  %s1 = inlined_call_operand.vmem [shape: f32[1,128], index: 1, kind: input, shape index: {}]
  %s2 = inlined_call_operand.vmem [shape: f32[1,128], index: 2, kind: input, shape index: {}]
  %s3 = inlined_call_operand.hbm [shape: f32[128,128], index: 3, kind: input, shape index: {}]
  %s4 = inlined_call_operand.vmem [shape: f32[1,128], index: 4, kind: input, shape index: {}]
  %s5 = inlined_call_operand.hbm [shape: f32[128,128], index: 5, kind: output, shape index: {}]
  %s6 = sld [smem:[#allocation0]]
  $region61: #{tpu_custom_call.1} parent=0
    _
  %s8 = ssub.s32 1, %s6
  %s9 = scalar_select 0, %s8, %s6
  $region1: #{tpu_custom_call.1} parent=0
    #allocation2 [shape = 'u8[65536]{0}', space=vmem, size = 0x10000, scoped, tag = 'input window, operand 0']
    #allocation3 [shape = 's32[2]{0}', space=sflag, size = 0x8, scoped, tag = 'scoped memory for tpu_custom_call.1']
    #allocation4 [shape = 's32[2]{0}', space=sflag, size = 0x8, scoped, tag = 'scoped memory for tpu_custom_call.1']
    #allocation5 [shape = 'u8[65536]{0}', space=vmem, size = 0x10000, scoped, tag = 'input window, operand 3, single buffered']
    #allocation6 [shape = 's32[1]{0}', space=sflag, size = 0x4, scoped, tag = 'scoped memory for tpu_custom_call.1']
    #allocation7 [shape = 'u8[65536]{0}', space=vmem, size = 0x10000, scoped, tag = 'output window, operand 0']
    %10 = vsyncpa [#allocation3], 0
    %s11 = scalar_lea.sflag [#allocation3], 1
    %12 = vsyncpa %s11, 0
    %13 = vsyncpa [#allocation6], 0
    %14 = vsyncpa [#allocation4], 0
    %s15 = scalar_lea.sflag [#allocation4], 1
    %16 = vsyncpa %s15, 0
    loop: start=0, step=1, limit=4
    $region2: #{tpu_custom_call.1} parent=1 // loop_pre_header
      _
    $region3: #{tpu_custom_call.1} parent=1 // loop_header
      %s18 = sphi 0, %s22
      %p19 = scmp.ge.s32.totalorder %s18, 4
      %s25 = sphi 0, %s37
      %s26 = sphi 0, %s33
      %s27 = sphi 0, %s25
      %s28 = sphi 0, %s26
      %s29 = sphi 0, %s27
      %s30 = sphi 0, %s28
      %s40 = sphi 0, %s42
      %s43 = sphi 0, %s40
      %s44 = sphi 0, %s43
      %s60 = sphi 0, %s44
      %s64 = sphi 0, %s64
      %s66 = sphi 0, %s64
      %s67 = sphi 0, %s66
      %s81 = sphi 0, %s67
      %s85 = sphi 0, %s85
      %s87 = sphi 0, %s85
      %s88 = sphi 0, %s87
      %s102 = sphi 0, %s88
      %s108 = sphi 0, %s110
      %s111 = sphi 0, %s108
      %s112 = sphi 0, %s111
      %s128 = sphi 0, %s112
      %s134 = sphi 0, %s136
      %s137 = sphi 0, %s134
      %s138 = sphi 0, %s137
      %s154 = sphi 0, %s138
      %s162 = sphi 0, %s164
      %s165 = sphi 0, %s162
      %s166 = sphi 0, %s165
      %s182 = sphi 0, %s166
    $region4: #{tpu_custom_call.1} parent=1 // loop_header_branch
      %21 = sbr.rel (%p19) target = $region8
    $region5: #{tpu_custom_call.1} parent=1 // loop_body
      %s23 = ssub.s32 %s18, 1
      %s24 = ssub.s32 %s18, 2
      %s31 = sadd.s32 1, %s26
      %p32 = scmp.ge.s32.totalorder %s31, 1
      %s33 = scalar_select %p32, 0, %s31
      %s34 = sadd.s32 1, %s25
      %s35 = scalar_select %p32, %s34, %s25
      %p36 = scmp.ge.s32.totalorder %s35, 2
      %s37 = scalar_select %p36, 0, %s35
      %s38 = ssub.s32 %s25, %s37
      %p39 = scmp.eq.s32.totalorder %s38, 0
      %s41 = sadd.s32 %s40, 1
      %s42 = scalar_select %p39, %s40, %s41
      %p45 = pneg %p39
      %p46 = scmp.eq.s32.totalorder %s18, 1
      %p47 = por %p45, %p46
      %p48 = scmp.ne.s32.totalorder %s40, %s43
      %p49 = scmp.eq.s32.totalorder %s18, 0
      %p50 = por %p48, %p49
      %p51 = scmp.ne.s32.totalorder %s40, %s43
      %p52 = scmp.eq.s32.totalorder %s23, 1
      %p53 = por %p51, %p52
      %p54 = scmp.ne.s32.totalorder %s43, %s44
      %p55 = scmp.eq.s32.totalorder %s23, 0
      %p56 = por %p54, %p55
      %p57 = scmp.ne.s32.totalorder %s43, %s44
      %p58 = scmp.eq.s32.totalorder %s24, 1
      %p59 = por %p57, %p58
      %p61 = scmp.ne.s32.totalorder %s44, %s60
      %p62 = scmp.eq.s32.totalorder %s24, 0
      %p63 = por %p61, %p62
      %s65 = sadd.s32 %s64, 1
      %p68 = scmp.eq.s32.totalorder %s18, 1
      %p69 = scmp.ne.s32.totalorder %s64, %s66
      %p70 = scmp.eq.s32.totalorder %s18, 0
      %p71 = por %p69, %p70
      %p72 = scmp.ne.s32.totalorder %s64, %s66
      %p73 = scmp.eq.s32.totalorder %s23, 1
      %p74 = por %p72, %p73
      %p75 = scmp.ne.s32.totalorder %s66, %s67
      %p76 = scmp.eq.s32.totalorder %s23, 0
      %p77 = por %p75, %p76
      %p78 = scmp.ne.s32.totalorder %s66, %s67
      %p79 = scmp.eq.s32.totalorder %s24, 1
      %p80 = por %p78, %p79
      %p82 = scmp.ne.s32.totalorder %s67, %s81
      %p83 = scmp.eq.s32.totalorder %s24, 0
      %p84 = por %p82, %p83
      %s86 = sadd.s32 %s85, 1
      %p89 = scmp.eq.s32.totalorder %s18, 1
      %p90 = scmp.ne.s32.totalorder %s85, %s87
      %p91 = scmp.eq.s32.totalorder %s18, 0
      %p92 = por %p90, %p91
      %p93 = scmp.ne.s32.totalorder %s85, %s87
      %p94 = scmp.eq.s32.totalorder %s23, 1
      %p95 = por %p93, %p94
      %p96 = scmp.ne.s32.totalorder %s87, %s88
      %p97 = scmp.eq.s32.totalorder %s23, 0
      %p98 = por %p96, %p97
      %p99 = scmp.ne.s32.totalorder %s87, %s88
      %p100 = scmp.eq.s32.totalorder %s24, 1
      %p101 = por %p99, %p100
      %p103 = scmp.ne.s32.totalorder %s88, %s102
      %p104 = scmp.eq.s32.totalorder %s24, 0
      %p105 = por %p103, %p104
      %s106 = ssub.s32 %s26, %s33
      %p107 = scmp.eq.s32.totalorder %s106, 0
      %s109 = sadd.s32 %s108, 1
      %s110 = scalar_select %p107, %s108, %s109
      %p113 = pneg %p107
      %p114 = scmp.eq.s32.totalorder %s18, 1
      %p115 = por %p113, %p114
      %p116 = scmp.ne.s32.totalorder %s108, %s111
      %p117 = scmp.eq.s32.totalorder %s18, 0
      %p118 = por %p116, %p117
      %p119 = scmp.ne.s32.totalorder %s108, %s111
      %p120 = scmp.eq.s32.totalorder %s23, 1
      %p121 = por %p119, %p120
      %p122 = scmp.ne.s32.totalorder %s111, %s112
      %p123 = scmp.eq.s32.totalorder %s23, 0
      %p124 = por %p122, %p123
      %p125 = scmp.ne.s32.totalorder %s111, %s112
      %p126 = scmp.eq.s32.totalorder %s24, 1
      %p127 = por %p125, %p126
      %p129 = scmp.ne.s32.totalorder %s112, %s128
      %p130 = scmp.eq.s32.totalorder %s24, 0
      %p131 = por %p129, %p130
      %s132 = ssub.s32 %s26, %s33
      %p133 = scmp.eq.s32.totalorder %s132, 0
      %s135 = sadd.s32 %s134, 1
      %s136 = scalar_select %p133, %s134, %s135
      %p139 = pneg %p133
      %p140 = scmp.eq.s32.totalorder %s18, 1
      %p141 = por %p139, %p140
      %p142 = scmp.ne.s32.totalorder %s134, %s137
      %p143 = scmp.eq.s32.totalorder %s18, 0
      %p144 = por %p142, %p143
      %p145 = scmp.ne.s32.totalorder %s134, %s137
      %p146 = scmp.eq.s32.totalorder %s23, 1
      %p147 = por %p145, %p146
      %p148 = scmp.ne.s32.totalorder %s137, %s138
      %p149 = scmp.eq.s32.totalorder %s23, 0
      %p150 = por %p148, %p149
      %p151 = scmp.ne.s32.totalorder %s137, %s138
      %p152 = scmp.eq.s32.totalorder %s24, 1
      %p153 = por %p151, %p152
      %p155 = scmp.ne.s32.totalorder %s138, %s154
      %p156 = scmp.eq.s32.totalorder %s24, 0
      %p157 = por %p155, %p156
      %s158 = ssub.s32 %s25, %s37
      %s159 = ssub.s32 %s26, %s33
      %s160 = sor.u32 %s158, %s159
      %p161 = scmp.eq.s32.totalorder %s160, 0
      %s163 = sadd.s32 %s162, 1
      %s164 = scalar_select %p161, %s162, %s163
      %p167 = pneg %p161
      %p168 = scmp.eq.s32.totalorder %s18, 1
      %p169 = por %p167, %p168
      %p170 = scmp.ne.s32.totalorder %s162, %s165
      %p171 = scmp.eq.s32.totalorder %s18, 0
      %p172 = por %p170, %p171
      %p173 = scmp.ne.s32.totalorder %s162, %s165
      %p174 = scmp.eq.s32.totalorder %s23, 1
      %p175 = por %p173, %p174
      %p176 = scmp.ne.s32.totalorder %s165, %s166
      %p177 = scmp.eq.s32.totalorder %s23, 0
      %p178 = por %p176, %p177
      %p179 = scmp.ne.s32.totalorder %s165, %s166
      %p180 = scmp.eq.s32.totalorder %s24, 1
      %p181 = por %p179, %p180
      %p183 = scmp.ne.s32.totalorder %s166, %s182
      %p184 = scmp.eq.s32.totalorder %s24, 0
      %p185 = por %p183, %p184
      %p186 = scmp.le.s32.totalorder 1, %s18
      %p187 = scmp.lt.s32.totalorder %s18, 3
      %p188 = pnand %p186, %p187
      %p189 = pneg %p188
      // Predicated region
      $region9: #{tpu_custom_call.1} parent=5 // pred_check
        _
      $region10: #{tpu_custom_call.1} parent=5 // pred_check_branch
        %191 = sbr.rel (%p188) target = $region12
      $region11: #{tpu_custom_call.1} parent=5 // pred_region
        %s192 = ssub.s32 %s18, 1
        // Predicated region
        $region13: #{tpu_custom_call.1} parent=11 // pred_check
          %p193 = pneg %p77
        $region14: #{tpu_custom_call.1} parent=11 // pred_check_branch
          %195 = sbr.rel (%p193) target = $region16
        $region15: #{tpu_custom_call.1} parent=11 // pred_region
          _
        $region16: #{tpu_custom_call.1} parent=11 // pred_fallthru
          _
        // Predicated region
        $region17: #{tpu_custom_call.1} parent=11 // pred_check
          %p196 = pneg %p98
        $region18: #{tpu_custom_call.1} parent=11 // pred_check_branch
          %198 = sbr.rel (%p196) target = $region20
        $region19: #{tpu_custom_call.1} parent=11 // pred_region
          _
        $region20: #{tpu_custom_call.1} parent=11 // pred_fallthru
          _
        // Predicated region
        $region21: #{tpu_custom_call.1} parent=11 // pred_check
          %p199 = pneg %p124
        $region22: #{tpu_custom_call.1} parent=11 // pred_check_branch
          %201 = sbr.rel (%p199) target = $region24
        $region23: #{tpu_custom_call.1} parent=11 // pred_region
          %s203 = ssub.s32 2048, 2048
          %204 = vsyncadd [#allocation6], %s203
          %s205 = smul.addr %s28, 128
          %s206 = scalar_lea.hbm %s3, %s205
          %s207 = sshll.u32 [#allocation5], 4
          %s208 = int_to_ptr.vmem [resolvable:$true] %s207
          %213 = dma.hbm_to_vmem [thread:$0]  %s206, 2048, %s208, [#allocation6], 128, 128, 8
        $region24: #{tpu_custom_call.1} parent=11 // pred_fallthru
          _
        // Predicated region
        $region25: #{tpu_custom_call.1} parent=11 // pred_check
          %p214 = pneg %p150
        $region26: #{tpu_custom_call.1} parent=11 // pred_check_branch
          %216 = sbr.rel (%p214) target = $region28
        $region27: #{tpu_custom_call.1} parent=11 // pred_region
          %p217 = scmp.lt.s32.totalorder %s28, 0
          %s218 = scalar_select %p217, %s28, 0
          %s219 = scalar_lea.vmem %s4, %s218
        $region28: #{tpu_custom_call.1} parent=11 // pred_fallthru
          _
      $region12: #{tpu_custom_call.1} parent=5 // pred_fallthru
        _
      %p220 = scmp.lt.s32.totalorder %s18, 2
      // Predicated region
      $region29: #{tpu_custom_call.1} parent=5 // pred_check
        %p221 = pneg %p220
      $region30: #{tpu_custom_call.1} parent=5 // pred_check_branch
        %223 = sbr.rel (%p221) target = $region32
      $region31: #{tpu_custom_call.1} parent=5 // pred_region
        // Predicated region
        $region33: #{tpu_custom_call.1} parent=31 // pred_check
          %p224 = pneg %p50
        $region34: #{tpu_custom_call.1} parent=31 // pred_check_branch
          %226 = sbr.rel (%p224) target = $region36
        $region35: #{tpu_custom_call.1} parent=31 // pred_region
          %s227 = sand.u32 %s40, 1
          %s228 = scalar_lea.sflag [#allocation3], %s227
          %s229 = sand.u32 %s40, 1
          %s230 = smul.addr %s229, 64
          %s231 = scalar_lea.vmem [#allocation2], %s230
          %s232 = smul.u32 8, %s25
          %s234 = ssub.s32 1024, 1024
          %235 = vsyncadd %s228, %s234
          %s236 = smul.addr %s232, 128
          %s237 = scalar_lea.hbm %s0, %s236
          %s238 = sshll.u32 %s231, 4
          %s239 = int_to_ptr.vmem [resolvable:$true] %s238
          %244 = dma.hbm_to_vmem [thread:$0]  %s237, 1024, %s239, %s228, 128, 128, 8
        $region36: #{tpu_custom_call.1} parent=31 // pred_fallthru
          _
      $region32: #{tpu_custom_call.1} parent=5 // pred_fallthru
        _
      %p245 = scmp.le.s32.totalorder 1, %s18
      %p246 = scmp.lt.s32.totalorder %s18, 3
      %p247 = pnand %p245, %p246
      %p248 = pneg %p247
      // Predicated region
      $region37: #{tpu_custom_call.1} parent=5 // pred_check
        _
      $region38: #{tpu_custom_call.1} parent=5 // pred_check_branch
        %250 = sbr.rel (%p247) target = $region40
      $region39: #{tpu_custom_call.1} parent=5 // pred_region
        %s251 = ssub.s32 %s18, 1
        %s252 = sand.u32 %s43, 1
        %s253 = scalar_lea.sflag [#allocation3], %s252
        %s254 = sand.u32 %s43, 1
        %s255 = smul.addr %s254, 64
        %s256 = scalar_lea.vmem [#allocation2], %s255
        // Predicated region
        $region41: #{tpu_custom_call.1} parent=39 // pred_check
          %p257 = pneg %p56
        $region42: #{tpu_custom_call.1} parent=39 // pred_check_branch
          %259 = sbr.rel (%p257) target = $region44
        $region43: #{tpu_custom_call.1} parent=39 // pred_region
          %260 = dma.done %s253, 1024
        $region44: #{tpu_custom_call.1} parent=39 // pred_fallthru
          _
        // Predicated region
        $region45: #{tpu_custom_call.1} parent=39 // pred_check
          %p261 = pneg %p124
        $region46: #{tpu_custom_call.1} parent=39 // pred_check_branch
          %263 = sbr.rel (%p261) target = $region48
        $region47: #{tpu_custom_call.1} parent=39 // pred_region
          %264 = dma.done [#allocation6], 2048
        $region48: #{tpu_custom_call.1} parent=39 // pred_fallthru
          _
        %s265 = sand.u32 %s43, 1
        %s266 = scalar_lea.sflag [#allocation3], %s265
        %s267 = sand.u32 %s43, 1
        %s268 = smul.addr %s267, 64
        %s269 = scalar_lea.vmem [#allocation2], %s268
        %p270 = pneg %p56
        %p271 = pneg %p53
        %p272 = pneg %p77
        %p273 = pneg %p74
        %p274 = pneg %p98
        %p275 = pneg %p95
        %p276 = pneg %p124
        %p277 = pneg %p121
        %p278 = scmp.lt.s32.totalorder %s28, 0
        %s279 = scalar_select %p278, %s28, 0
        %s280 = scalar_lea.vmem %s4, %s279
        %p281 = pneg %p150
        %p282 = pneg %p147
        %p283 = pneg %p178
        %p284 = pneg %p175
        %s285 = sand.u32 %s165, 1
        %s286 = scalar_lea.sflag [#allocation4], %s285
        %s287 = sand.u32 %s165, 1
        %s288 = smul.addr %s287, 64
        %s289 = scalar_lea.vmem [#allocation7], %s288
        %s290 = smul.u32 8, %s27
        %p291 = scmp.lt.s32.totalorder %s28, 0
        %s292 = scalar_select %p291, %s28, 0
        %s293 = scalar_lea.vmem %s4, %s292
        %s294 = smul.u32 8, %s27
        %v295 = vld [vmem:[%s256] sm:$0xff]
        %v296 = vld [vmem:[%s256 + $0x8] sm:$0xff]
        %v297 = vld [vmem:[%s256 + $0x10] sm:$0xff]
        %v298 = vld [vmem:[%s256 + $0x18] sm:$0xff]
        %v299 = vld [vmem:[%s256 + $0x20] sm:$0xff]
        %v300 = vld [vmem:[%s256 + $0x28] sm:$0xff]
        %v301 = vld [vmem:[%s256 + $0x30] sm:$0xff]
        %v302 = vld [vmem:[%s256 + $0x38] sm:$0xff]
        %v303 = vld [vmem:[%s1] sm:$0x1]
        %v304 = vld [vmem:[%s2] sm:$0x1]
        %305 = vadd.xlane.f32.xlu0 %v295
        %v306 = vpop.xlane.xlu0 %305
        %307 = vadd.xlane.f32.xlu0 %v296
        %v308 = vpop.xlane.xlu0 %307
        %309 = vadd.xlane.f32.xlu0 %v297
        %v310 = vpop.xlane.xlu0 %309
        %311 = vadd.xlane.f32.xlu0 %v298
        %v312 = vpop.xlane.xlu0 %311
        %313 = vadd.xlane.f32.xlu0 %v299
        %v314 = vpop.xlane.xlu0 %313
        %315 = vadd.xlane.f32.xlu0 %v300
        %v316 = vpop.xlane.xlu0 %315
        %317 = vadd.xlane.f32.xlu0 %v301
        %v318 = vpop.xlane.xlu0 %317
        %319 = vadd.xlane.f32.xlu0 %v302
        %v320 = vpop.xlane.xlu0 %319
        %v321 = vrcp.pop 128.0
        %v322 = vmul.f32 %v306, %v321
        %v323 = vmul.f32 %v308, %v321
        %v324 = vmul.f32 %v310, %v321
        %v325 = vmul.f32 %v312, %v321
        %v326 = vmul.f32 %v314, %v321
        %v327 = vmul.f32 %v316, %v321
        %v328 = vmul.f32 %v318, %v321
        %v329 = vmul.f32 %v320, %v321
        %v330 = vsub.f32 %v295, %v322
        %v331 = vsub.f32 %v296, %v323
        %v332 = vsub.f32 %v297, %v324
        %v333 = vsub.f32 %v298, %v325
        %v334 = vsub.f32 %v299, %v326
        %v335 = vsub.f32 %v300, %v327
        %v336 = vsub.f32 %v301, %v328
        %v337 = vsub.f32 %v302, %v329
        %v338 = vmul.f32 %v330, %v330
        %v339 = vmul.f32 %v331, %v331
        %v340 = vmul.f32 %v332, %v332
        %v341 = vmul.f32 %v333, %v333
        %v342 = vmul.f32 %v334, %v334
        %v343 = vmul.f32 %v335, %v335
        %v344 = vmul.f32 %v336, %v336
        %v345 = vmul.f32 %v337, %v337
        %346 = vadd.xlane.f32.xlu0 %v338
        %v347 = vpop.xlane.xlu0 %346
        %348 = vadd.xlane.f32.xlu0 %v339
        %v349 = vpop.xlane.xlu0 %348
        %350 = vadd.xlane.f32.xlu0 %v340
        %v351 = vpop.xlane.xlu0 %350
        %352 = vadd.xlane.f32.xlu0 %v341
        %v353 = vpop.xlane.xlu0 %352
        %354 = vadd.xlane.f32.xlu0 %v342
        %v355 = vpop.xlane.xlu0 %354
        %356 = vadd.xlane.f32.xlu0 %v343
        %v357 = vpop.xlane.xlu0 %356
        %358 = vadd.xlane.f32.xlu0 %v344
        %v359 = vpop.xlane.xlu0 %358
        %360 = vadd.xlane.f32.xlu0 %v345
        %v361 = vpop.xlane.xlu0 %360
        %v362 = vmul.f32 %v347, 0.007874016
        %v363 = vmul.f32 %v349, 0.007874016
        %v364 = vmul.f32 %v351, 0.007874016
        %v365 = vmul.f32 %v353, 0.007874016
        %v366 = vmul.f32 %v355, 0.007874016
        %v367 = vmul.f32 %v357, 0.007874016
        %v368 = vmul.f32 %v359, 0.007874016
        %v369 = vmul.f32 %v361, 0.007874016
        %v370 = vrsqrt.pop %v362
        %v371 = vmul.f32 %v362, %v370
        %vm372 = vcmp.eq.f32.partialorder %v362, inf
        %v373 = vsel %vm372, %v362, %v371
        %vm374 = vcmp.eq.f32.partialorder %v362, 0.0
        %v375 = vand.u32 %v362, 2147483648
        %v376 = vsel %vm374, %v375, %v373
        %v377 = vrsqrt.pop %v363
        %v378 = vmul.f32 %v363, %v377
        %vm379 = vcmp.eq.f32.partialorder %v363, inf
        %v380 = vsel %vm379, %v363, %v378
        %vm381 = vcmp.eq.f32.partialorder %v363, 0.0
        %v382 = vand.u32 %v363, 2147483648
        %v383 = vsel %vm381, %v382, %v380
        %v384 = vrsqrt.pop %v364
        %v385 = vmul.f32 %v364, %v384
        %vm386 = vcmp.eq.f32.partialorder %v364, inf
        %v387 = vsel %vm386, %v364, %v385
        %vm388 = vcmp.eq.f32.partialorder %v364, 0.0
        %v389 = vand.u32 %v364, 2147483648
        %v390 = vsel %vm388, %v389, %v387
        %v391 = vrsqrt.pop %v365
        %v392 = vmul.f32 %v365, %v391
        %vm393 = vcmp.eq.f32.partialorder %v365, inf
        %v394 = vsel %vm393, %v365, %v392
        %vm395 = vcmp.eq.f32.partialorder %v365, 0.0
        %v396 = vand.u32 %v365, 2147483648
        %v397 = vsel %vm395, %v396, %v394
        %v398 = vrsqrt.pop %v366
        %v399 = vmul.f32 %v366, %v398
        %vm400 = vcmp.eq.f32.partialorder %v366, inf
        %v401 = vsel %vm400, %v366, %v399
        %vm402 = vcmp.eq.f32.partialorder %v366, 0.0
        %v403 = vand.u32 %v366, 2147483648
        %v404 = vsel %vm402, %v403, %v401
        %v405 = vrsqrt.pop %v367
        %v406 = vmul.f32 %v367, %v405
        %vm407 = vcmp.eq.f32.partialorder %v367, inf
        %v408 = vsel %vm407, %v367, %v406
        %vm409 = vcmp.eq.f32.partialorder %v367, 0.0
        %v410 = vand.u32 %v367, 2147483648
        %v411 = vsel %vm409, %v410, %v408
        %v412 = vrsqrt.pop %v368
        %v413 = vmul.f32 %v368, %v412
        %vm414 = vcmp.eq.f32.partialorder %v368, inf
        %v415 = vsel %vm414, %v368, %v413
        %vm416 = vcmp.eq.f32.partialorder %v368, 0.0
        %v417 = vand.u32 %v368, 2147483648
        %v418 = vsel %vm416, %v417, %v415
        %v419 = vrsqrt.pop %v369
        %v420 = vmul.f32 %v369, %v419
        %vm421 = vcmp.eq.f32.partialorder %v369, inf
        %v422 = vsel %vm421, %v369, %v420
        %vm423 = vcmp.eq.f32.partialorder %v369, 0.0
        %v424 = vand.u32 %v369, 2147483648
        %v425 = vsel %vm423, %v424, %v422
        %v426 = vadd.f32 %v376, 1e-06
        %v427 = vadd.f32 %v383, 1e-06
        %v428 = vadd.f32 %v390, 1e-06
        %v429 = vadd.f32 %v397, 1e-06
        %v430 = vadd.f32 %v404, 1e-06
        %v431 = vadd.f32 %v411, 1e-06
        %v432 = vadd.f32 %v418, 1e-06
        %v433 = vadd.f32 %v425, 1e-06
        %v434 = vrcp.pop %v426
        %v435 = vrcp.pop %v427
        %v436 = vrcp.pop %v428
        %v437 = vrcp.pop %v429
        %v438 = vrcp.pop %v430
        %v439 = vrcp.pop %v431
        %v440 = vrcp.pop %v432
        %v441 = vrcp.pop %v433
        %v442 = vmul.f32 %v330, %v434
        %v443 = vmul.f32 %v331, %v435
        %v444 = vmul.f32 %v332, %v436
        %v445 = vmul.f32 %v333, %v437
        %v446 = vmul.f32 %v334, %v438
        %v447 = vmul.f32 %v335, %v439
        %v448 = vmul.f32 %v336, %v440
        %v449 = vmul.f32 %v337, %v441
        %v451 = vlaneseq
        %v452 = vshrl.u32 %v451, 7
        %v453 = vsub.s32 0, %v452
        %v454 = vrot.slane %v303, %v453
        %v456 = vmul.f32 %v454, %v442
        %v457 = vmul.f32 %v454, %v443
        %v458 = vmul.f32 %v454, %v444
        %v459 = vmul.f32 %v454, %v445
        %v460 = vmul.f32 %v454, %v446
        %v461 = vmul.f32 %v454, %v447
        %v462 = vmul.f32 %v454, %v448
        %v463 = vmul.f32 %v454, %v449
        %v465 = vlaneseq
        %v466 = vshrl.u32 %v465, 7
        %v467 = vsub.s32 0, %v466
        %v468 = vrot.slane %v304, %v467
        %v470 = vadd.f32 %v456, %v468
        %v471 = vadd.f32 %v457, %v468
        %v472 = vadd.f32 %v458, %v468
        %v473 = vadd.f32 %v459, %v468
        %v474 = vadd.f32 %v460, %v468
        %v475 = vadd.f32 %v461, %v468
        %v476 = vadd.f32 %v462, %v468
        %v477 = vadd.f32 %v463, %v468
        %v478 = vld [vmem:[#allocation5] sm:$0xff]
        %v479 = vld [vmem:[#allocation5 + $0x8] sm:$0xff]
        %v480 = vld [vmem:[#allocation5 + $0x10] sm:$0xff]
        %v481 = vld [vmem:[#allocation5 + $0x18] sm:$0xff]
        %v482 = vld [vmem:[#allocation5 + $0x20] sm:$0xff]
        %v483 = vld [vmem:[#allocation5 + $0x28] sm:$0xff]
        %v484 = vld [vmem:[#allocation5 + $0x30] sm:$0xff]
        %v485 = vld [vmem:[#allocation5 + $0x38] sm:$0xff]
        %v486 = vld [vmem:[#allocation5 + $0x40] sm:$0xff]
        %v487 = vld [vmem:[#allocation5 + $0x48] sm:$0xff]
        %v488 = vld [vmem:[#allocation5 + $0x50] sm:$0xff]
        %v489 = vld [vmem:[#allocation5 + $0x58] sm:$0xff]
        %v490 = vld [vmem:[#allocation5 + $0x60] sm:$0xff]
        %v491 = vld [vmem:[#allocation5 + $0x68] sm:$0xff]
        %v492 = vld [vmem:[#allocation5 + $0x70] sm:$0xff]
        %v493 = vld [vmem:[#allocation5 + $0x78] sm:$0xff]
        %v494 = vld [vmem:[%s293] sm:$0x1]
        %v496 = vlaneseq
        %v497 = vshrl.u32 %v496, 7
        %v498 = vsub.s32 0, %v497
        %v499 = vrot.slane %v494, %v498
        %501 = vmatprep.subr.mxu0 0.0
        %502 = vmatpush1.msra.mxu0 %v493
        %503 = vmatprep.subr.mxu0 0.0
        %504 = vmatpush1.msra.mxu0 %v492
        %505 = vmatprep.subr.mxu0 0.0
        %506 = vmatpush1.msra.mxu0 %v491
        %507 = vmatprep.subr.mxu0 0.0
        %508 = vmatpush1.msra.mxu0 %v490
        %509 = vmatprep.subr.mxu0 0.0
        %510 = vmatpush1.msra.mxu0 %v489
        %511 = vmatprep.subr.mxu0 0.0
        %512 = vmatpush1.msra.mxu0 %v488
        %513 = vmatprep.subr.mxu0 0.0
        %514 = vmatpush1.msra.mxu0 %v487
        %515 = vmatprep.subr.mxu0 0.0
        %516 = vmatpush1.msra.mxu0 %v486
        %517 = vmatprep.subr.mxu0 0.0
        %518 = vmatpush1.msra.mxu0 %v485
        %519 = vmatprep.subr.mxu0 0.0
        %520 = vmatpush1.msra.mxu0 %v484
        %521 = vmatprep.subr.mxu0 0.0
        %522 = vmatpush1.msra.mxu0 %v483
        %523 = vmatprep.subr.mxu0 0.0
        %524 = vmatpush1.msra.mxu0 %v482
        %525 = vmatprep.subr.mxu0 0.0
        %526 = vmatpush1.msra.mxu0 %v481
        %527 = vmatprep.subr.mxu0 0.0
        %528 = vmatpush1.msra.mxu0 %v480
        %529 = vmatprep.subr.mxu0 0.0
        %530 = vmatpush1.msra.mxu0 %v479
        %531 = vmatprep.subr.mxu0 0.0
        %532 = vmatpush1.msra.mxu0 %v478
        %533 = vmatprep.subr.mxu0 0.0
        %534 = vmatpush2.msra.mxu0 0.0
        %535 = vmatprep.subr.mxu0 0.0
        %536 = vmatpush2.msra.mxu0 0.0
        %537 = vmatprep.subr.mxu0 0.0
        %538 = vmatpush2.msra.mxu0 0.0
        %539 = vmatprep.subr.mxu0 0.0
        %540 = vmatpush2.msra.mxu0 0.0
        %541 = vmatprep.subr.mxu0 0.0
        %542 = vmatpush2.msra.mxu0 0.0
        %543 = vmatprep.subr.mxu0 0.0
        %544 = vmatpush2.msra.mxu0 0.0
        %545 = vmatprep.subr.mxu0 0.0
        %546 = vmatpush2.msra.mxu0 0.0
        %547 = vmatprep.subr.mxu0 0.0
        %548 = vmatpush2.msra.mxu0 0.0
        %549 = vmatprep.subr.mxu0 0.0
        %550 = vmatpush2.msra.mxu0 0.0
        %551 = vmatprep.subr.mxu0 0.0
        %552 = vmatpush2.msra.mxu0 0.0
        %553 = vmatprep.subr.mxu0 0.0
        %554 = vmatpush2.msra.mxu0 0.0
        %555 = vmatprep.subr.mxu0 0.0
        %556 = vmatpush2.msra.mxu0 0.0
        %557 = vmatprep.subr.mxu0 0.0
        %558 = vmatpush2.msra.mxu0 0.0
        %559 = vmatprep.subr.mxu0 0.0
        %560 = vmatpush2.msra.mxu0 0.0
        %561 = vmatprep.subr.mxu0 0.0
        %562 = vmatpush2.msra.mxu0 0.0
        %563 = vmatprep.subr.mxu0 0.0
        %564 = vmatpush2.msra.mxu0 0.0
        %565 = vmatprep.mubr.f32.mxu0 0.0
        %566 = vmatmul.mubr.f32.gmra.mxu0 %v470
        %v567 = vpop.f32.mrf.mxu0
        %v568 = vadd.f32 %v499, %v567
        %v569 = vpop.f32.mrf.mxu0
        %570 = vmatprep.mubr.f32.mxu0 0.0
        %571 = vmatmul.mubr.f32.gmra.mxu0 %v471
        %v572 = vpop.f32.mrf.mxu0
        %v573 = vadd.f32 %v499, %v572
        %v574 = vpop.f32.mrf.mxu0
        %575 = vmatprep.mubr.f32.mxu0 0.0
        %576 = vmatmul.mubr.f32.gmra.mxu0 %v472
        %v577 = vpop.f32.mrf.mxu0
        %v578 = vadd.f32 %v499, %v577
        %v579 = vpop.f32.mrf.mxu0
        %580 = vmatprep.mubr.f32.mxu0 0.0
        %581 = vmatmul.mubr.f32.gmra.mxu0 %v473
        %v582 = vpop.f32.mrf.mxu0
        %v583 = vadd.f32 %v499, %v582
        %v584 = vpop.f32.mrf.mxu0
        %585 = vmatprep.mubr.f32.mxu0 0.0
        %586 = vmatmul.mubr.f32.gmra.mxu0 %v474
        %v587 = vpop.f32.mrf.mxu0
        %v588 = vadd.f32 %v499, %v587
        %v589 = vpop.f32.mrf.mxu0
        %590 = vmatprep.mubr.f32.mxu0 0.0
        %591 = vmatmul.mubr.f32.gmra.mxu0 %v475
        %v592 = vpop.f32.mrf.mxu0
        %v593 = vadd.f32 %v499, %v592
        %v594 = vpop.f32.mrf.mxu0
        %595 = vmatprep.mubr.f32.mxu0 0.0
        %596 = vmatmul.mubr.f32.gmra.mxu0 %v476
        %v597 = vpop.f32.mrf.mxu0
        %v598 = vadd.f32 %v499, %v597
        %v599 = vpop.f32.mrf.mxu0
        %600 = vmatprep.mubr.f32.mxu0 0.0
        %601 = vmatmul.mubr.f32.gmra.mxu0 %v477
        %v602 = vpop.f32.mrf.mxu0
        %v603 = vadd.f32 %v499, %v602
        %v604 = vpop.f32.mrf.mxu0
        %605 = vdwg.mxu0
        %v606 = vadd.f32 %v568, %v295
        %v607 = vadd.f32 %v573, %v296
        %v608 = vadd.f32 %v578, %v297
        %v609 = vadd.f32 %v583, %v298
        %v610 = vadd.f32 %v588, %v299
        %v611 = vadd.f32 %v593, %v300
        %v612 = vadd.f32 %v598, %v301
        %v613 = vadd.f32 %v603, %v302
        %614 = vst [vmem:[%s289] sm:$0xff] %v606
        %615 = vst [vmem:[%s289 + $0x8] sm:$0xff] %v607
        %616 = vst [vmem:[%s289 + $0x10] sm:$0xff] %v608
        %617 = vst [vmem:[%s289 + $0x18] sm:$0xff] %v609
        %618 = vst [vmem:[%s289 + $0x20] sm:$0xff] %v610
        %619 = vst [vmem:[%s289 + $0x28] sm:$0xff] %v611
        %620 = vst [vmem:[%s289 + $0x30] sm:$0xff] %v612
        %621 = vst [vmem:[%s289 + $0x38] sm:$0xff] %v613
        %s622 = sand.u32 %s165, 1
        %s623 = scalar_lea.sflag [#allocation4], %s622
        %s624 = sand.u32 %s165, 1
        %s625 = smul.addr %s624, 64
        %s626 = scalar_lea.vmem [#allocation7], %s625
        // Predicated region
        $region49: #{tpu_custom_call.1} parent=39 // pred_check
          %p627 = pneg %p175
        $region50: #{tpu_custom_call.1} parent=39 // pred_check_branch
          %629 = sbr.rel (%p627) target = $region52
        $region51: #{tpu_custom_call.1} parent=39 // pred_region
          %s630 = smul.u32 8, %s27
          %s632 = ssub.s32 1024, 1024
          %633 = vsyncadd %s623, %s632
          %s634 = sadd.s32 %s28, %s630
          %s635 = smul.addr %s634, 128
          %s636 = scalar_lea.hbm %s5, %s635
          %s637 = sshll.u32 %s626, 4
          %s638 = int_to_ptr.vmem [resolvable:$true] %s637
          %643 = dma.vmem_to_hbm [thread:$0]  %s638, 1024, %s636, %s623, 128, 128, 8
        $region52: #{tpu_custom_call.1} parent=39 // pred_fallthru
          _
      $region40: #{tpu_custom_call.1} parent=5 // pred_fallthru
        _
      %p644 = scmp.le.s32.totalorder 2, %s18
      // Predicated region
      $region53: #{tpu_custom_call.1} parent=5 // pred_check
        %p645 = pneg %p644
      $region54: #{tpu_custom_call.1} parent=5 // pred_check_branch
        %647 = sbr.rel (%p645) target = $region56
      $region55: #{tpu_custom_call.1} parent=5 // pred_region
        %s648 = ssub.s32 %s18, 2
        // Predicated region
        $region57: #{tpu_custom_call.1} parent=55 // pred_check
          %p649 = pneg %p181
        $region58: #{tpu_custom_call.1} parent=55 // pred_check_branch
          %651 = sbr.rel (%p649) target = $region60
        $region59: #{tpu_custom_call.1} parent=55 // pred_region
          %s652 = sand.u32 %s166, 1
          %s653 = scalar_lea.sflag [#allocation4], %s652
          %s654 = sand.u32 %s166, 1
          %s655 = smul.addr %s654, 64
          %s656 = scalar_lea.vmem [#allocation7], %s655
          %657 = dma.done %s653, 1024
        $region60: #{tpu_custom_call.1} parent=55 // pred_fallthru
          _
      $region56: #{tpu_custom_call.1} parent=5 // pred_fallthru
        _
    $region6: #{tpu_custom_call.1} parent=1 // loop_footer
      %s22 = sadd.s32 1, %s18
    $region7: #{tpu_custom_call.1} parent=1 // loop_footer_branch
      %17 = sbr.rel target = $region3
    $region8: #{tpu_custom_call.1} parent=1 // loop_exit
      _
    %658 = vsyncpa [#allocation3], 1
    %s659 = scalar_lea.sflag [#allocation3], 1
    %660 = vsyncpa %s659, 1
    %661 = vsyncpa [#allocation6], 1
    %662 = vsyncpa [#allocation4], 1
    %s663 = scalar_lea.sflag [#allocation4], 1
    %664 = vsyncpa %s663, 1

</llo_original>
